<compile_context>
chip_gen: v7x
topology: tpu7x:2x2x1
jax: 0.10.0
libtpu: 0.0.40
codegen_flags: <defaults>
</compile_context>

<pallas_src>
import jax
import jax.numpy as jnp
from jax.experimental import pallas as pl
from jax.experimental.pallas import tpu as pltpu


def _linear_bias_kernel(x_ref, w_ref, b_ref, o_ref):
    # x_ref: (TILE_M, K) rows of inputs; w_ref: (K, N); b_ref: (1, N).
    x = x_ref[...].astype(jnp.float32)
    w = w_ref[...].astype(jnp.float32)
    tm, k = x.shape
    n = w.shape[1]
    # Seed the accumulator with the bias (sublane-broadcast of the (1, N) row).
    acc = jnp.broadcast_to(b_ref[...].astype(jnp.float32), (tm, n))
    # Unrolled VPU FMAs over the tiny contraction dim (K = in_features = 3):
    # (TILE_M, 1) * (1, N) broadcasts are plain VALU work; no MXU involved.
    for c in range(k):
        acc = acc + x[:, c:c + 1] * w[c:c + 1, :]
    o_ref[...] = acc.astype(o_ref.dtype)


def _padded_bytes(rows, cols, itemsize):
    """HBM/VMEM bytes of a 2-D f32-ish array after (8, 128) tile padding."""
    return pl.cdiv(rows, 8) * 8 * pl.cdiv(cols, 128) * 128 * itemsize


def linear_with_bias(x, weight, bias, *, tile_m=4096):
    """Pallas equivalent of torch.nn.Linear(K, N, bias=True).

    x:      (..., K)
    weight: (N, K)   -- PyTorch Linear weight layout
    bias:   (N,)
    returns (..., N)
    """
    *lead, k = x.shape
    n = weight.shape[0]
    m = 1
    for d in lead:
        m *= d

    x2 = x.reshape(m, k)           # zero-copy view (feature dim already last)
    w_t = jnp.transpose(weight)    # (K, N), 12 floats
    b2 = bias.reshape(1, n)

    # Row tile: multiple of 8 sublanes, capped by tile_m.  No wrapper-side
    # padding: Pallas masks the final partial block when tm does not divide m.
    tm = max(8, min(tile_m, 8 * pl.cdiv(m, 8)))
    tm = 8 * (tm // 8)
    grid = (pl.cdiv(m, tm),)

    itemsize = jnp.dtype(x.dtype).itemsize
    # Bandwidth-bound: account for the real, lane-padded HBM traffic
    # ((., 3) / (., 4) minor dims are padded to 128 lanes in HBM and VMEM).
    cost = pl.CostEstimate(
        flops=2 * m * k * n,
        transcendentals=0,
        bytes_accessed=(
            _padded_bytes(m, k, itemsize)      # read x
            + _padded_bytes(k, n, itemsize)    # read W^T
            + _padded_bytes(1, n, itemsize)    # read b
            + _padded_bytes(m, n, itemsize)    # write y
        ),
    )

    out = pl.pallas_call(
        _linear_bias_kernel,
        out_shape=jax.ShapeDtypeStruct((m, n), x.dtype),
        grid_spec=pl.GridSpec(
            grid=grid,
            in_specs=[
                pl.BlockSpec((tm, k), lambda i: (i, 0)),  # row tile of x
                pl.BlockSpec((k, n), lambda i: (0, 0)),   # resident weight
                pl.BlockSpec((1, n), lambda i: (0, 0)),   # resident bias
            ],
            out_specs=pl.BlockSpec((tm, n), lambda i: (i, 0)),
        ),
        compiler_params=pltpu.CompilerParams(
            dimension_semantics=("parallel",),
            # Double-buffered, lane-padded tiles are 2048*tm bytes (8 MiB at
            # tm=4096); 32 MiB gives headroom on every chip incl. v5e's 16 MiB
            # scoped default and stays under v7x's 64 MiB-per-TC physical.
            vmem_limit_bytes=32 * 1024 * 1024,
        ),
        cost_estimate=cost,
    )(x2, w_t, b2)

    return out.reshape(*lead, n)


if __name__ == "__main__":
    key = jax.random.PRNGKey(0)
    k_x, k_w, k_b, k_x2 = jax.random.split(key, 4)

    batch, seq, in_features, out_features = 2, 8, 3, 4
    x = jax.random.normal(k_x, (batch, seq, in_features), dtype=jnp.float32)
    # PyTorch Linear parameter layout: weight (out, in), bias (out,)
    weight = jax.random.normal(
        k_w, (out_features, in_features), dtype=jnp.float32) * 0.5
    bias = jax.random.normal(k_b, (out_features,), dtype=jnp.float32) * 0.1

    # tile_m=8 -> grid=(2,) at this demo scale, exercising the pipelined,
    # megacore-parallel grid path.  Default tile_m=4096 for real workloads.
    out = linear_with_bias(x, weight, bias, tile_m=8)
    out = jax.block_until_ready(out)

    ref = jnp.einsum("bsk,nk->bsn", x, weight) + bias
    assert out.shape == (batch, seq, out_features)
    assert jnp.allclose(out, ref, atol=1e-5, rtol=1e-5), "mismatch vs reference"

    # Second check: M not divisible by the tile -> exercises the masked
    # partial final block (no wrapper pad/slice needed).
    x_odd = jax.random.normal(k_x2, (2, 9, in_features), dtype=jnp.float32)
    out_odd = jax.block_until_ready(
        linear_with_bias(x_odd, weight, bias, tile_m=8))
    ref_odd = jnp.einsum("bsk,nk->bsn", x_odd, weight) + bias
    assert out_odd.shape == (2, 9, out_features)
    assert jnp.allclose(out_odd, ref_odd, atol=1e-5, rtol=1e-5), \
        "mismatch vs reference (partial block)"

    print("KERNEL_OK")
</pallas_src>

<mosaic_0001>
module attributes {stable_mosaic.version = 11 : i64} {
  func.func @_linear_bias_kernel(%arg0: i32, %arg1: memref<8x3xf32, #tpu.memory_space<vmem>>, %arg2: memref<3x4xf32, #tpu.memory_space<vmem>>, %arg3: memref<1x4xf32, #tpu.memory_space<vmem>>, %arg4: memref<8x4xf32, #tpu.memory_space<vmem>>) attributes {dimension_semantics = [#tpu.dimension_semantics<parallel>], iteration_bounds = array<i64: 2>, scalar_prefetch = 0 : i64, scratch_operands = 0 : i64, tpu.core_type = #tpu.core_type<tc>, window_params = [{transform_indices = @transform_0, window_bounds = array<i64: 8, 3>}, {pipeline_mode = #tpu.pipeline_mode<synchronous>, transform_indices = @transform_1, window_bounds = array<i64: 3, 4>}, {pipeline_mode = #tpu.pipeline_mode<synchronous>, transform_indices = @transform_2, window_bounds = array<i64: 1, 4>}, {transform_indices = @transform_3, window_bounds = array<i64: 8, 4>}]} {
    %c0 = arith.constant 0 : index
    %c0_0 = arith.constant 0 : index
    %0 = vector.load %arg1[%c0, %c0_0] : memref<8x3xf32, #tpu.memory_space<vmem>>, vector<8x3xf32>
    %c0_1 = arith.constant 0 : index
    %c0_2 = arith.constant 0 : index
    %1 = vector.load %arg2[%c0_1, %c0_2] : memref<3x4xf32, #tpu.memory_space<vmem>>, vector<3x4xf32>
    %c0_3 = arith.constant 0 : index
    %c0_4 = arith.constant 0 : index
    %2 = vector.load %arg3[%c0_3, %c0_4] : memref<1x4xf32, #tpu.memory_space<vmem>>, vector<1x4xf32>
    %3 = vector.shape_cast %2 : vector<1x4xf32> to vector<1x4xf32>
    %4 = vector.broadcast %3 : vector<1x4xf32> to vector<8x4xf32>
    %5 = vector.extract_strided_slice %0 {offsets = [0, 0], sizes = [8, 1], strides = [1, 1]} : vector<8x3xf32> to vector<8x1xf32>
    %6 = vector.extract_strided_slice %1 {offsets = [0, 0], sizes = [1, 4], strides = [1, 1]} : vector<3x4xf32> to vector<1x4xf32>
    %7 = vector.broadcast %5 : vector<8x1xf32> to vector<8x4xf32>
    %8 = vector.broadcast %6 : vector<1x4xf32> to vector<8x4xf32>
    %9 = arith.mulf %7, %8 : vector<8x4xf32>
    %10 = arith.addf %4, %9 : vector<8x4xf32>
    %11 = vector.extract_strided_slice %0 {offsets = [0, 1], sizes = [8, 1], strides = [1, 1]} : vector<8x3xf32> to vector<8x1xf32>
    %12 = vector.extract_strided_slice %1 {offsets = [1, 0], sizes = [1, 4], strides = [1, 1]} : vector<3x4xf32> to vector<1x4xf32>
    %13 = vector.broadcast %11 : vector<8x1xf32> to vector<8x4xf32>
    %14 = vector.broadcast %12 : vector<1x4xf32> to vector<8x4xf32>
    %15 = arith.mulf %13, %14 : vector<8x4xf32>
    %16 = arith.addf %10, %15 : vector<8x4xf32>
    %17 = vector.extract_strided_slice %0 {offsets = [0, 2], sizes = [8, 1], strides = [1, 1]} : vector<8x3xf32> to vector<8x1xf32>
    %18 = vector.extract_strided_slice %1 {offsets = [2, 0], sizes = [1, 4], strides = [1, 1]} : vector<3x4xf32> to vector<1x4xf32>
    %19 = vector.broadcast %17 : vector<8x1xf32> to vector<8x4xf32>
    %20 = vector.broadcast %18 : vector<1x4xf32> to vector<8x4xf32>
    %21 = arith.mulf %19, %20 : vector<8x4xf32>
    %22 = arith.addf %16, %21 : vector<8x4xf32>
    %c0_5 = arith.constant 0 : index
    %c0_6 = arith.constant 0 : index
    %23 = vector.load %arg4[%c0_5, %c0_6] : memref<8x4xf32, #tpu.memory_space<vmem>>, vector<8x4xf32>
    tpu.vector_store %arg4[%c0_5, %c0_6], %22 {strides = array<i32>} : memref<8x4xf32, #tpu.memory_space<vmem>>, vector<8x4xf32>,
    return
  }
  func.func @transform_0(%arg0: i32) -> (i32, i32) {
    %c0_i32 = arith.constant 0 : i32
    %c0_i32_0 = arith.constant 0 : i32
    return %arg0, %c0_i32 : i32, i32
  }
  func.func @transform_1(%arg0: i32) -> (i32, i32) {
    %c0_i32 = arith.constant 0 : i32
    %c0_i32_0 = arith.constant 0 : i32
    %c0_i32_1 = arith.constant 0 : i32
    return %c0_i32, %c0_i32_0 : i32, i32
  }
  func.func @transform_2(%arg0: i32) -> (i32, i32) {
    %c0_i32 = arith.constant 0 : i32
    %c0_i32_0 = arith.constant 0 : i32
    %c0_i32_1 = arith.constant 0 : i32
    return %c0_i32, %c0_i32_0 : i32, i32
  }
  func.func @transform_3(%arg0: i32) -> (i32, i32) {
    %c0_i32 = arith.constant 0 : i32
    %c0_i32_0 = arith.constant 0 : i32
    return %arg0, %c0_i32 : i32, i32
  }
}

</mosaic_0001>

<llo_original>
// kernel: tpu_custom_call.1
$region0: #{tpu_custom_call.1}
  #allocation0 [shape = 'u32[]', space=smem, size = 0x4, offset = 0x4, fixed_abs, tag = 'smem constant byte address 0x4 - core index']
  #allocation1 [shape = 'u32[144,128]{1,0:T(1,128)}', space=vmem, size = 0x12000, scoped, tag = 'internal scratch']
  %s0 = inlined_call_operand.vmem [shape: f32[16,3], index: 0, kind: input, shape index: {}]
  %s1 = inlined_call_operand.vmem [shape: f32[3,4], index: 1, kind: input, shape index: {}]
  %s2 = inlined_call_operand.vmem [shape: f32[1,4], index: 2, kind: input, shape index: {}]
  %s3 = inlined_call_operand.vmem [shape: f32[16,4], index: 3, kind: output, shape index: {}]
  %s4 = sld [smem:[#allocation0]]
  $region45: #{tpu_custom_call.1} parent=0
    _
  %s6 = ssub.s32 1, %s4
  %s7 = scalar_select 0, %s6, %s4
  loop: start=0, step=1, limit=4
  $region2: #{tpu_custom_call.1} parent=0 // loop_pre_header
    _
  $region3: #{tpu_custom_call.1} parent=0 // loop_header
    %s9 = sphi 0, %s13
    %p10 = scmp.ge.s32.totalorder %s9, 4
    %s19 = sphi 0, %s21
    %s22 = sphi 0, %s19
    %s23 = sphi 0, %s22
    %s39 = sphi 0, %s23
    %s43 = sphi 0, %s43
    %s45 = sphi 0, %s43
    %s46 = sphi 0, %s45
    %s60 = sphi 0, %s46
    %s64 = sphi 0, %s64
    %s66 = sphi 0, %s64
    %s67 = sphi 0, %s66
    %s81 = sphi 0, %s67
    %s87 = sphi 0, %s89
    %s90 = sphi 0, %s87
    %s91 = sphi 0, %s90
    %s107 = sphi 0, %s91
  $region4: #{tpu_custom_call.1} parent=0 // loop_header_branch
    %12 = sbr.rel (%p10) target = $region8
  $region5: #{tpu_custom_call.1} parent=0 // loop_body
    %s14 = ssub.s32 %s9, 1
    %s15 = ssub.s32 %s9, 2
    %s16 = sadd.s32 %s9, 1
    %s17 = ssub.s32 %s9, %s16
    %p18 = scmp.eq.s32.totalorder %s17, 0
    %s20 = sadd.s32 %s19, 1
    %s21 = scalar_select %p18, %s19, %s20
    %p24 = pneg %p18
    %p25 = scmp.eq.s32.totalorder %s9, 1
    %p26 = por %p24, %p25
    %p27 = scmp.ne.s32.totalorder %s19, %s22
    %p28 = scmp.eq.s32.totalorder %s9, 0
    %p29 = por %p27, %p28
    %p30 = scmp.ne.s32.totalorder %s19, %s22
    %p31 = scmp.eq.s32.totalorder %s14, 1
    %p32 = por %p30, %p31
    %p33 = scmp.ne.s32.totalorder %s22, %s23
    %p34 = scmp.eq.s32.totalorder %s14, 0
    %p35 = por %p33, %p34
    %p36 = scmp.ne.s32.totalorder %s22, %s23
    %p37 = scmp.eq.s32.totalorder %s15, 1
    %p38 = por %p36, %p37
    %p40 = scmp.ne.s32.totalorder %s23, %s39
    %p41 = scmp.eq.s32.totalorder %s15, 0
    %p42 = por %p40, %p41
    %s44 = sadd.s32 %s43, 1
    %p47 = scmp.eq.s32.totalorder %s9, 1
    %p48 = scmp.ne.s32.totalorder %s43, %s45
    %p49 = scmp.eq.s32.totalorder %s9, 0
    %p50 = por %p48, %p49
    %p51 = scmp.ne.s32.totalorder %s43, %s45
    %p52 = scmp.eq.s32.totalorder %s14, 1
    %p53 = por %p51, %p52
    %p54 = scmp.ne.s32.totalorder %s45, %s46
    %p55 = scmp.eq.s32.totalorder %s14, 0
    %p56 = por %p54, %p55
    %p57 = scmp.ne.s32.totalorder %s45, %s46
    %p58 = scmp.eq.s32.totalorder %s15, 1
    %p59 = por %p57, %p58
    %p61 = scmp.ne.s32.totalorder %s46, %s60
    %p62 = scmp.eq.s32.totalorder %s15, 0
    %p63 = por %p61, %p62
    %s65 = sadd.s32 %s64, 1
    %p68 = scmp.eq.s32.totalorder %s9, 1
    %p69 = scmp.ne.s32.totalorder %s64, %s66
    %p70 = scmp.eq.s32.totalorder %s9, 0
    %p71 = por %p69, %p70
    %p72 = scmp.ne.s32.totalorder %s64, %s66
    %p73 = scmp.eq.s32.totalorder %s14, 1
    %p74 = por %p72, %p73
    %p75 = scmp.ne.s32.totalorder %s66, %s67
    %p76 = scmp.eq.s32.totalorder %s14, 0
    %p77 = por %p75, %p76
    %p78 = scmp.ne.s32.totalorder %s66, %s67
    %p79 = scmp.eq.s32.totalorder %s15, 1
    %p80 = por %p78, %p79
    %p82 = scmp.ne.s32.totalorder %s67, %s81
    %p83 = scmp.eq.s32.totalorder %s15, 0
    %p84 = por %p82, %p83
    %s85 = ssub.s32 %s9, %s16
    %p86 = scmp.eq.s32.totalorder %s85, 0
    %s88 = sadd.s32 %s87, 1
    %s89 = scalar_select %p86, %s87, %s88
    %p92 = pneg %p86
    %p93 = scmp.eq.s32.totalorder %s9, 1
    %p94 = por %p92, %p93
    %p95 = scmp.ne.s32.totalorder %s87, %s90
    %p96 = scmp.eq.s32.totalorder %s9, 0
    %p97 = por %p95, %p96
    %p98 = scmp.ne.s32.totalorder %s87, %s90
    %p99 = scmp.eq.s32.totalorder %s14, 1
    %p100 = por %p98, %p99
    %p101 = scmp.ne.s32.totalorder %s90, %s91
    %p102 = scmp.eq.s32.totalorder %s14, 0
    %p103 = por %p101, %p102
    %p104 = scmp.ne.s32.totalorder %s90, %s91
    %p105 = scmp.eq.s32.totalorder %s15, 1
    %p106 = por %p104, %p105
    %p108 = scmp.ne.s32.totalorder %s91, %s107
    %p109 = scmp.eq.s32.totalorder %s15, 0
    %p110 = por %p108, %p109
    %p111 = scmp.le.s32.totalorder 1, %s9
    %p112 = scmp.lt.s32.totalorder %s9, 3
    %p113 = pnand %p111, %p112
    %p114 = pneg %p113
    // Predicated region
    $region9: #{tpu_custom_call.1} parent=5 // pred_check
      _
    $region10: #{tpu_custom_call.1} parent=5 // pred_check_branch
      %116 = sbr.rel (%p113) target = $region12
    $region11: #{tpu_custom_call.1} parent=5 // pred_region
      %s117 = ssub.s32 %s9, 1
      // Predicated region
      $region13: #{tpu_custom_call.1} parent=11 // pred_check
        %p118 = pneg %p56
      $region14: #{tpu_custom_call.1} parent=11 // pred_check_branch
        %120 = sbr.rel (%p118) target = $region16
      $region15: #{tpu_custom_call.1} parent=11 // pred_region
        _
      $region16: #{tpu_custom_call.1} parent=11 // pred_fallthru
        _
      // Predicated region
      $region17: #{tpu_custom_call.1} parent=11 // pred_check
        %p121 = pneg %p77
      $region18: #{tpu_custom_call.1} parent=11 // pred_check_branch
        %123 = sbr.rel (%p121) target = $region20
      $region19: #{tpu_custom_call.1} parent=11 // pred_region
        _
      $region20: #{tpu_custom_call.1} parent=11 // pred_fallthru
        _
    $region12: #{tpu_custom_call.1} parent=5 // pred_fallthru
      _
    %p124 = scmp.lt.s32.totalorder %s9, 2
    // Predicated region
    $region21: #{tpu_custom_call.1} parent=5 // pred_check
      %p125 = pneg %p124
    $region22: #{tpu_custom_call.1} parent=5 // pred_check_branch
      %127 = sbr.rel (%p125) target = $region24
    $region23: #{tpu_custom_call.1} parent=5 // pred_region
      // Predicated region
      $region25: #{tpu_custom_call.1} parent=23 // pred_check
        %p128 = pneg %p29
      $region26: #{tpu_custom_call.1} parent=23 // pred_check_branch
        %130 = sbr.rel (%p128) target = $region28
      $region27: #{tpu_custom_call.1} parent=23 // pred_region
        %p131 = scmp.lt.s32.totalorder %s9, 1
        %s132 = scalar_select %p131, %s9, 1
        %s133 = smul.addr %s132, 8
        %s134 = scalar_lea.vmem %s0, %s133
      $region28: #{tpu_custom_call.1} parent=23 // pred_fallthru
        _
    $region24: #{tpu_custom_call.1} parent=5 // pred_fallthru
      _
    %p135 = scmp.le.s32.totalorder 1, %s9
    %p136 = scmp.lt.s32.totalorder %s9, 3
    %p137 = pnand %p135, %p136
    %p138 = pneg %p137
    // Predicated region
    $region29: #{tpu_custom_call.1} parent=5 // pred_check
      _
    $region30: #{tpu_custom_call.1} parent=5 // pred_check_branch
      %140 = sbr.rel (%p137) target = $region32
    $region31: #{tpu_custom_call.1} parent=5 // pred_region
      %s141 = ssub.s32 %s9, 1
      %p142 = scmp.lt.s32.totalorder %s14, 1
      %s143 = scalar_select %p142, %s14, 1
      %s144 = smul.addr %s143, 8
      %s145 = scalar_lea.vmem %s0, %s144
      %p146 = pneg %p35
      %p147 = pneg %p32
      %p148 = pneg %p56
      %p149 = pneg %p53
      %p150 = pneg %p77
      %p151 = pneg %p74
      %p152 = pneg %p103
      %p153 = pneg %p100
      %p154 = scmp.lt.s32.totalorder %s14, 1
      %s155 = scalar_select %p154, %s14, 1
      %s156 = smul.addr %s155, 8
      %s157 = scalar_lea.vmem %s3, %s156
      %p158 = scmp.lt.s32.totalorder %s14, 1
      %s159 = scalar_select %p158, %s14, 1
      %s160 = smul.addr %s159, 8
      %s161 = scalar_lea.vmem %s0, %s160
      %p162 = scmp.lt.s32.totalorder %s14, 1
      %s163 = scalar_select %p162, %s14, 1
      %s164 = smul.addr %s163, 8
      %s165 = scalar_lea.vmem %s3, %s164
      %v166 = vld [vmem:[%s161] sm:$0xff]
      %v167 = vld [vmem:[%s1] sm:$0x7]
      %v168 = vld [vmem:[%s2] sm:$0x1]
      %v170 = vlaneseq
      %v171 = vshrl.u32 %v170, 7
      %v172 = vsub.s32 0, %v171
      %v173 = vrot.slane %v168, %v172
      %176 = vset.pattern.permute.xlu0 0
      %177 = vperm.xlu0 %176, %v166
      %v178 = vpop.permute.xlu0 %177
      %v180 = vlaneseq
      %v181 = vshrl.u32 %v180, 7
      %v182 = vsub.s32 0, %v181
      %v183 = vrot.slane %v167, %v182
      %v184 = vmul.f32 %v178, %v183
      %v185 = vadd.f32 %v173, %v184
      %186 = vset.pattern.permute.xlu0 1
      %187 = vperm.xlu0 %186, %v166
      %v188 = vpop.permute.xlu0 %187
      %v190 = vlaneseq
      %v191 = vshrl.u32 %v190, 7
      %v192 = vsub.s32 1, %v191
      %v193 = vrot.slane %v167, %v192
      %v194 = vmul.f32 %v188, %v193
      %v195 = vadd.f32 %v185, %v194
      %196 = vset.pattern.permute.xlu0 2
      %197 = vperm.xlu0 %196, %v166
      %v198 = vpop.permute.xlu0 %197
      %v200 = vlaneseq
      %v201 = vshrl.u32 %v200, 7
      %v202 = vsub.s32 2, %v201
      %v203 = vrot.slane %v167, %v202
      %v204 = vmul.f32 %v198, %v203
      %v205 = vadd.f32 %v195, %v204
      %vm206 = vcmask 31744
      %207 = vst.msk [vmem:[%s165] sm:$0xff] %vm206, %v205
      %p208 = scmp.lt.s32.totalorder %s14, 1
      %s209 = scalar_select %p208, %s14, 1
      %s210 = smul.addr %s209, 8
      %s211 = scalar_lea.vmem %s3, %s210
      // Predicated region
      $region33: #{tpu_custom_call.1} parent=31 // pred_check
        %p212 = pneg %p100
      $region34: #{tpu_custom_call.1} parent=31 // pred_check_branch
        %214 = sbr.rel (%p212) target = $region36
      $region35: #{tpu_custom_call.1} parent=31 // pred_region
        _
      $region36: #{tpu_custom_call.1} parent=31 // pred_fallthru
        _
    $region32: #{tpu_custom_call.1} parent=5 // pred_fallthru
      _
    %p215 = scmp.le.s32.totalorder 2, %s9
    // Predicated region
    $region37: #{tpu_custom_call.1} parent=5 // pred_check
      %p216 = pneg %p215
    $region38: #{tpu_custom_call.1} parent=5 // pred_check_branch
      %218 = sbr.rel (%p216) target = $region40
    $region39: #{tpu_custom_call.1} parent=5 // pred_region
      %s219 = ssub.s32 %s9, 2
      // Predicated region
      $region41: #{tpu_custom_call.1} parent=39 // pred_check
        %p220 = pneg %p106
      $region42: #{tpu_custom_call.1} parent=39 // pred_check_branch
        %222 = sbr.rel (%p220) target = $region44
      $region43: #{tpu_custom_call.1} parent=39 // pred_region
        %p223 = scmp.lt.s32.totalorder %s15, 1
        %s224 = scalar_select %p223, %s15, 1
        %s225 = smul.addr %s224, 8
        %s226 = scalar_lea.vmem %s3, %s225
      $region44: #{tpu_custom_call.1} parent=39 // pred_fallthru
        _
    $region40: #{tpu_custom_call.1} parent=5 // pred_fallthru
      _
  $region6: #{tpu_custom_call.1} parent=0 // loop_footer
    %s13 = sadd.s32 1, %s9
  $region7: #{tpu_custom_call.1} parent=0 // loop_footer_branch
    %8 = sbr.rel target = $region3
  $region8: #{tpu_custom_call.1} parent=0 // loop_exit
    _

</llo_original>
